<compile_context>
chip_gen: v7x
topology: tpu7x:2x2x1
jax: 0.10.0
libtpu: 0.0.40
codegen_flags: <defaults>
</compile_context>

<pallas_src>
import math

import jax
import jax.numpy as jnp
from jax.experimental import pallas as pl
from jax.experimental.pallas import tpu as pltpu

TAU = 2.0
V_THRESHOLD = 1.0e9   # effectively infinite -> no spikes ever fire
V_RESET = 0.0

MAX_ROW_TILE = 512    # 512 rows * 128 lanes * 4 B = 256 KiB per timestep slice
MAX_T_TILE = 16       # timesteps blocked per grid step (block up to 4 MiB)


def _cdiv(a, b):
    return -(-a // b)


def _round_up(a, b):
    return _cdiv(a, b) * b


def _li_kernel(x_ref, vseq_ref, v_scratch):
    # Grid: (row_tiles [parallel], time_blocks [arbitrary/sequential]).
    # Time is innermost, so each row tile sees its full time range before the
    # next row tile starts; the carried membrane potential lives in v_scratch
    # across time blocks and is re-initialized when t wraps to 0.
    @pl.when(pl.program_id(1) == 0)
    def _():
        v_scratch[...] = jnp.zeros_like(v_scratch)

    t_tile = x_ref.shape[0]
    for i in range(t_tile):                        # statically unrolled
        x_t = x_ref[i].astype(jnp.float32)         # (row_tile, 128)
        if i == 0:
            v_prev = v_scratch[...]
        else:
            # The value just stored IS the carry: re-read it from the output
            # block instead of keeping a 256 KiB SSA carry (avoids spills and
            # an extra VMEM store per step).
            v_prev = vseq_ref[i - 1].astype(jnp.float32)
        # neuronal_charge with v_reset = 0:  v += (x - v) / tau
        # (tau = 2.0 -> *0.5 is an exact power-of-two reciprocal, bit-identical
        #  to the reference's division; for general tau keep the division.)
        v = v_prev + (x_t - v_prev) * (1.0 / TAU)
        # neuronal_fire / neuronal_reset: with v_threshold = 1e9 the heaviside
        # is identically 0 for any finite activation, so both are no-ops and
        # the spike stream needs no HBM write (zeros produced in the wrapper).
        vseq_ref[i] = v.astype(vseq_ref.dtype)

    # Persist the carry for the next time block of this row tile.
    v_scratch[...] = vseq_ref[t_tile - 1].astype(jnp.float32)


def leaky_integrator_forward(x):
    """x: [T, N, C, H, W] (or any [T, ...]) float32, time-major.

    Returns (spike_seq, v_seq), both shaped like x. spike_seq is the module's
    forward() output; v_seq is the stored membrane-potential sequence.
    """
    T = x.shape[0]
    step_shape = x.shape[1:]
    n_elem = int(math.prod(step_shape)) if step_shape else 1

    # Lane-dense [rows, 128] slab per timestep, rows rounded to (8,128) tiling.
    rows = _round_up(_cdiv(n_elem, 128), 8)

    # Balanced row tiling: padding is at most 7 rows per tile. Force >= 2 row
    # tiles whenever possible so the "parallel" axis shards across both v7x
    # TensorCores (negligible cost on single-TC v5e/v6e).
    num_row_tiles = _cdiv(rows, MAX_ROW_TILE)
    if rows >= 16:
        num_row_tiles = max(num_row_tiles, 2)
    row_tile = _round_up(_cdiv(rows, num_row_tiles), 8)
    rows_pad = row_tile * num_row_tiles

    # Balanced time blocking: zero time padding when T <= MAX_T_TILE, otherwise
    # at most (num_t_tiles - 1) padded trailing timesteps. Padded steps come
    # after all real ones, so they never corrupt real outputs (only sliced off).
    num_t_tiles = _cdiv(T, MAX_T_TILE)
    t_tile = _cdiv(T, num_t_tiles)
    t_pad = t_tile * num_t_tiles

    pad_t = t_pad - T
    pad_e = rows_pad * 128 - n_elem

    x_flat = x.reshape(T, n_elem)
    if pad_t or pad_e:        # skip the extra HBM copy when nothing to pad
        x_flat = jnp.pad(x_flat, ((0, pad_t), (0, pad_e)))
    x_flat = x_flat.reshape(t_pad, rows_pad, 128)

    grid = (num_row_tiles, num_t_tiles)   # (parallel rows, sequential time)
    block_shape = (t_tile, row_tile, 128)
    idx_map = lambda r, t: (t, r, 0)

    # Deeper input prefetch hides HBM jitter / grid-step boundaries on the
    # sequential time axis (only worthwhile with enough steps to overlap).
    if num_row_tiles * num_t_tiles >= 3:
        in_spec = pl.BlockSpec(block_shape, idx_map, pipeline_mode=pl.Buffered(3))
    else:
        in_spec = pl.BlockSpec(block_shape, idx_map)
    out_spec = pl.BlockSpec(block_shape, idx_map)

    vseq_flat = pl.pallas_call(
        _li_kernel,
        out_shape=jax.ShapeDtypeStruct((t_pad, rows_pad, 128), x.dtype),
        grid_spec=pltpu.PrefetchScalarGridSpec(
            num_scalar_prefetch=0,
            grid=grid,
            in_specs=[in_spec],
            out_specs=out_spec,
            scratch_shapes=[pltpu.VMEM((row_tile, 128), jnp.float32)],
        ),
        compiler_params=pltpu.CompilerParams(
            dimension_semantics=("parallel", "arbitrary"),
            vmem_limit_bytes=40 * 1024 * 1024,
        ),
    )(x_flat)

    if pad_t == 0 and pad_e == 0:
        v_seq = vseq_flat.reshape(x.shape)
    else:
        v_seq = (
            vseq_flat.reshape(t_pad, rows_pad * 128)[:T, :n_elem].reshape(x.shape)
        )

    # With v_threshold = 1e9 the spike output is provably all zero; produce it
    # in the wrapper without any kernel-side HBM write.
    spike_seq = jnp.zeros_like(x)
    return spike_seq, v_seq


def _reference(x):
    """Pure-JAX reference of the same LIF dynamics (for sanity check)."""
    def step(v, xt):
        v = v + (xt - (v - V_RESET)) / TAU
        s = (v >= V_THRESHOLD).astype(x.dtype)
        v = s * V_RESET + (1.0 - s) * v
        return v, (s, v)

    v0 = jnp.zeros(x.shape[1:], x.dtype)
    _, (spikes, vs) = jax.lax.scan(step, v0, x)
    return spikes, vs


if __name__ == "__main__":
    key = jax.random.PRNGKey(0)

    # Primary test: [T, N, C, H, W] = [8, 2, 4, 16, 16]
    T, N, C, H, W = 8, 2, 4, 16, 16
    x = jax.random.normal(key, (T, N, C, H, W), dtype=jnp.float32)

    spike_seq, v_seq = leaky_integrator_forward(x)
    spike_seq = jax.block_until_ready(spike_seq)
    v_seq = jax.block_until_ready(v_seq)

    ref_spikes, ref_v = _reference(x)
    assert jnp.allclose(spike_seq, ref_spikes, atol=1e-6)
    assert jnp.allclose(v_seq, ref_v, atol=1e-5, rtol=1e-5)
    assert float(jnp.abs(spike_seq).max()) == 0.0  # pure integrator at thr=1e9

    # Secondary test: odd shape exercising the lane-tail padding path.
    x2 = jax.random.normal(jax.random.PRNGKey(1), (5, 2, 3, 7, 7), jnp.float32)
    s2, v2 = leaky_integrator_forward(x2)
    v2 = jax.block_until_ready(v2)
    ref_s2, ref_v2 = _reference(x2)
    assert jnp.allclose(s2, ref_s2, atol=1e-6)
    assert jnp.allclose(v2, ref_v2, atol=1e-5, rtol=1e-5)

    # Third test: T > MAX_T_TILE exercises the multi-time-block carry and the
    # Buffered(3) input pipeline (2 row tiles x 2 time blocks).
    x3 = jax.random.normal(jax.random.PRNGKey(2), (20, 2, 4, 16, 16), jnp.float32)
    s3, v3 = leaky_integrator_forward(x3)
    v3 = jax.block_until_ready(v3)
    ref_s3, ref_v3 = _reference(x3)
    assert jnp.allclose(s3, ref_s3, atol=1e-6)
    assert jnp.allclose(v3, ref_v3, atol=1e-5, rtol=1e-5)

    print("KERNEL_OK")
</pallas_src>

<mosaic_0001>
module attributes {stable_mosaic.version = 11 : i64} {
  func.func @_li_kernel(%arg0: i32, %arg1: i32, %arg2: memref<8x8x128xf32, #tpu.memory_space<vmem>>, %arg3: memref<8x8x128xf32, #tpu.memory_space<vmem>>, %arg4: memref<8x128xf32, #tpu.memory_space<vmem>>) attributes {dimension_semantics = [#tpu.dimension_semantics<parallel>, #tpu.dimension_semantics<arbitrary>], iteration_bounds = array<i64: 2, 1>, scalar_prefetch = 0 : i64, scratch_operands = 1 : i64, tpu.core_type = #tpu.core_type<tc>, window_params = [{transform_indices = @transform_0, window_bounds = array<i64: 8, 8, 128>}, {transform_indices = @transform_1, window_bounds = array<i64: 8, 8, 128>}]} {
    %c0_i32 = arith.constant 0 : i32
    %0 = arith.cmpi eq, %arg1, %c0_i32 : i32
    %1 = arith.extui %0 : i1 to i32
    %c0_i32_0 = arith.constant 0 : i32
    %2 = arith.cmpi ne, %1, %c0_i32_0 : i32
    scf.if %2 {
      %cst_76 = arith.constant 0.000000e+00 : f32
      %93 = vector.broadcast %cst_76 : f32 to vector<8x128xf32>
      %c0_77 = arith.constant 0 : index
      %c0_78 = arith.constant 0 : index
      %94 = vector.load %arg4[%c0_77, %c0_78] : memref<8x128xf32, #tpu.memory_space<vmem>>, vector<8x128xf32>
      tpu.vector_store %arg4[%c0_77, %c0_78], %93 {strides = array<i32>} : memref<8x128xf32, #tpu.memory_space<vmem>>, vector<8x128xf32>,
    } else {
    }
    %c0 = arith.constant 0 : index
    %c0_1 = arith.constant 0 : index
    %c0_2 = arith.constant 0 : index
    %3 = vector.load %arg2[%c0, %c0_1, %c0_2] : memref<8x8x128xf32, #tpu.memory_space<vmem>>, vector<1x8x128xf32>
    %4 = vector.shape_cast %3 : vector<1x8x128xf32> to vector<8x128xf32>
    %c0_3 = arith.constant 0 : index
    %c0_4 = arith.constant 0 : index
    %5 = vector.load %arg4[%c0_3, %c0_4] : memref<8x128xf32, #tpu.memory_space<vmem>>, vector<8x128xf32>
    %6 = arith.subf %4, %5 : vector<8x128xf32>
    %cst = arith.constant 5.000000e-01 : f32
    %7 = vector.broadcast %cst : f32 to vector<8x128xf32>
    %8 = arith.mulf %6, %7 : vector<8x128xf32>
    %9 = arith.addf %5, %8 : vector<8x128xf32>
    %c0_5 = arith.constant 0 : index
    %c0_6 = arith.constant 0 : index
    %c0_7 = arith.constant 0 : index
    %10 = vector.load %arg3[%c0_5, %c0_6, %c0_7] : memref<8x8x128xf32, #tpu.memory_space<vmem>>, vector<1x8x128xf32>
    %11 = vector.shape_cast %10 : vector<1x8x128xf32> to vector<8x128xf32>
    %12 = vector.shape_cast %9 : vector<8x128xf32> to vector<1x8x128xf32>
    tpu.vector_store %arg3[%c0_5, %c0_6, %c0_7], %12 {strides = array<i32>} : memref<8x8x128xf32, #tpu.memory_space<vmem>>, vector<1x8x128xf32>,
    %c1 = arith.constant 1 : index
    %c0_8 = arith.constant 0 : index
    %c0_9 = arith.constant 0 : index
    %13 = vector.load %arg2[%c1, %c0_8, %c0_9] : memref<8x8x128xf32, #tpu.memory_space<vmem>>, vector<1x8x128xf32>
    %14 = vector.shape_cast %13 : vector<1x8x128xf32> to vector<8x128xf32>
    %c0_10 = arith.constant 0 : index
    %c0_11 = arith.constant 0 : index
    %c0_12 = arith.constant 0 : index
    %15 = vector.load %arg3[%c0_10, %c0_11, %c0_12] : memref<8x8x128xf32, #tpu.memory_space<vmem>>, vector<1x8x128xf32>
    %16 = vector.shape_cast %15 : vector<1x8x128xf32> to vector<8x128xf32>
    %17 = arith.subf %14, %16 : vector<8x128xf32>
    %cst_13 = arith.constant 5.000000e-01 : f32
    %18 = vector.broadcast %cst_13 : f32 to vector<8x128xf32>
    %19 = arith.mulf %17, %18 : vector<8x128xf32>
    %20 = arith.addf %16, %19 : vector<8x128xf32>
    %c1_14 = arith.constant 1 : index
    %c0_15 = arith.constant 0 : index
    %c0_16 = arith.constant 0 : index
    %21 = vector.load %arg3[%c1_14, %c0_15, %c0_16] : memref<8x8x128xf32, #tpu.memory_space<vmem>>, vector<1x8x128xf32>
    %22 = vector.shape_cast %21 : vector<1x8x128xf32> to vector<8x128xf32>
    %23 = vector.shape_cast %20 : vector<8x128xf32> to vector<1x8x128xf32>
    tpu.vector_store %arg3[%c1_14, %c0_15, %c0_16], %23 {strides = array<i32>} : memref<8x8x128xf32, #tpu.memory_space<vmem>>, vector<1x8x128xf32>,
    %c2 = arith.constant 2 : index
    %c0_17 = arith.constant 0 : index
    %c0_18 = arith.constant 0 : index
    %24 = vector.load %arg2[%c2, %c0_17, %c0_18] : memref<8x8x128xf32, #tpu.memory_space<vmem>>, vector<1x8x128xf32>
    %25 = vector.shape_cast %24 : vector<1x8x128xf32> to vector<8x128xf32>
    %c1_19 = arith.constant 1 : index
    %c0_20 = arith.constant 0 : index
    %c0_21 = arith.constant 0 : index
    %26 = vector.load %arg3[%c1_19, %c0_20, %c0_21] : memref<8x8x128xf32, #tpu.memory_space<vmem>>, vector<1x8x128xf32>
    %27 = vector.shape_cast %26 : vector<1x8x128xf32> to vector<8x128xf32>
    %28 = arith.subf %25, %27 : vector<8x128xf32>
    %cst_22 = arith.constant 5.000000e-01 : f32
    %29 = vector.broadcast %cst_22 : f32 to vector<8x128xf32>
    %30 = arith.mulf %28, %29 : vector<8x128xf32>
    %31 = arith.addf %27, %30 : vector<8x128xf32>
    %c2_23 = arith.constant 2 : index
    %c0_24 = arith.constant 0 : index
    %c0_25 = arith.constant 0 : index
    %32 = vector.load %arg3[%c2_23, %c0_24, %c0_25] : memref<8x8x128xf32, #tpu.memory_space<vmem>>, vector<1x8x128xf32>
    %33 = vector.shape_cast %32 : vector<1x8x128xf32> to vector<8x128xf32>
    %34 = vector.shape_cast %31 : vector<8x128xf32> to vector<1x8x128xf32>
    tpu.vector_store %arg3[%c2_23, %c0_24, %c0_25], %34 {strides = array<i32>} : memref<8x8x128xf32, #tpu.memory_space<vmem>>, vector<1x8x128xf32>,
    %c3 = arith.constant 3 : index
    %c0_26 = arith.constant 0 : index
    %c0_27 = arith.constant 0 : index
    %35 = vector.load %arg2[%c3, %c0_26, %c0_27] : memref<8x8x128xf32, #tpu.memory_space<vmem>>, vector<1x8x128xf32>
    %36 = vector.shape_cast %35 : vector<1x8x128xf32> to vector<8x128xf32>
    %c2_28 = arith.constant 2 : index
    %c0_29 = arith.constant 0 : index
    %c0_30 = arith.constant 0 : index
    %37 = vector.load %arg3[%c2_28, %c0_29, %c0_30] : memref<8x8x128xf32, #tpu.memory_space<vmem>>, vector<1x8x128xf32>
    %38 = vector.shape_cast %37 : vector<1x8x128xf32> to vector<8x128xf32>
    %39 = arith.subf %36, %38 : vector<8x128xf32>
    %cst_31 = arith.constant 5.000000e-01 : f32
    %40 = vector.broadcast %cst_31 : f32 to vector<8x128xf32>
    %41 = arith.mulf %39, %40 : vector<8x128xf32>
    %42 = arith.addf %38, %41 : vector<8x128xf32>
    %c3_32 = arith.constant 3 : index
    %c0_33 = arith.constant 0 : index
    %c0_34 = arith.constant 0 : index
    %43 = vector.load %arg3[%c3_32, %c0_33, %c0_34] : memref<8x8x128xf32, #tpu.memory_space<vmem>>, vector<1x8x128xf32>
    %44 = vector.shape_cast %43 : vector<1x8x128xf32> to vector<8x128xf32>
    %45 = vector.shape_cast %42 : vector<8x128xf32> to vector<1x8x128xf32>
    tpu.vector_store %arg3[%c3_32, %c0_33, %c0_34], %45 {strides = array<i32>} : memref<8x8x128xf32, #tpu.memory_space<vmem>>, vector<1x8x128xf32>,
    %c4 = arith.constant 4 : index
    %c0_35 = arith.constant 0 : index
    %c0_36 = arith.constant 0 : index
    %46 = vector.load %arg2[%c4, %c0_35, %c0_36] : memref<8x8x128xf32, #tpu.memory_space<vmem>>, vector<1x8x128xf32>
    %47 = vector.shape_cast %46 : vector<1x8x128xf32> to vector<8x128xf32>
    %c3_37 = arith.constant 3 : index
    %c0_38 = arith.constant 0 : index
    %c0_39 = arith.constant 0 : index
    %48 = vector.load %arg3[%c3_37, %c0_38, %c0_39] : memref<8x8x128xf32, #tpu.memory_space<vmem>>, vector<1x8x128xf32>
    %49 = vector.shape_cast %48 : vector<1x8x128xf32> to vector<8x128xf32>
    %50 = arith.subf %47, %49 : vector<8x128xf32>
    %cst_40 = arith.constant 5.000000e-01 : f32
    %51 = vector.broadcast %cst_40 : f32 to vector<8x128xf32>
    %52 = arith.mulf %50, %51 : vector<8x128xf32>
    %53 = arith.addf %49, %52 : vector<8x128xf32>
    %c4_41 = arith.constant 4 : index
    %c0_42 = arith.constant 0 : index
    %c0_43 = arith.constant 0 : index
    %54 = vector.load %arg3[%c4_41, %c0_42, %c0_43] : memref<8x8x128xf32, #tpu.memory_space<vmem>>, vector<1x8x128xf32>
    %55 = vector.shape_cast %54 : vector<1x8x128xf32> to vector<8x128xf32>
    %56 = vector.shape_cast %53 : vector<8x128xf32> to vector<1x8x128xf32>
    tpu.vector_store %arg3[%c4_41, %c0_42, %c0_43], %56 {strides = array<i32>} : memref<8x8x128xf32, #tpu.memory_space<vmem>>, vector<1x8x128xf32>,
    %c5 = arith.constant 5 : index
    %c0_44 = arith.constant 0 : index
    %c0_45 = arith.constant 0 : index
    %57 = vector.load %arg2[%c5, %c0_44, %c0_45] : memref<8x8x128xf32, #tpu.memory_space<vmem>>, vector<1x8x128xf32>
    %58 = vector.shape_cast %57 : vector<1x8x128xf32> to vector<8x128xf32>
    %c4_46 = arith.constant 4 : index
    %c0_47 = arith.constant 0 : index
    %c0_48 = arith.constant 0 : index
    %59 = vector.load %arg3[%c4_46, %c0_47, %c0_48] : memref<8x8x128xf32, #tpu.memory_space<vmem>>, vector<1x8x128xf32>
    %60 = vector.shape_cast %59 : vector<1x8x128xf32> to vector<8x128xf32>
    %61 = arith.subf %58, %60 : vector<8x128xf32>
    %cst_49 = arith.constant 5.000000e-01 : f32
    %62 = vector.broadcast %cst_49 : f32 to vector<8x128xf32>
    %63 = arith.mulf %61, %62 : vector<8x128xf32>
    %64 = arith.addf %60, %63 : vector<8x128xf32>
    %c5_50 = arith.constant 5 : index
    %c0_51 = arith.constant 0 : index
    %c0_52 = arith.constant 0 : index
    %65 = vector.load %arg3[%c5_50, %c0_51, %c0_52] : memref<8x8x128xf32, #tpu.memory_space<vmem>>, vector<1x8x128xf32>
    %66 = vector.shape_cast %65 : vector<1x8x128xf32> to vector<8x128xf32>
    %67 = vector.shape_cast %64 : vector<8x128xf32> to vector<1x8x128xf32>
    tpu.vector_store %arg3[%c5_50, %c0_51, %c0_52], %67 {strides = array<i32>} : memref<8x8x128xf32, #tpu.memory_space<vmem>>, vector<1x8x128xf32>,
    %c6 = arith.constant 6 : index
    %c0_53 = arith.constant 0 : index
    %c0_54 = arith.constant 0 : index
    %68 = vector.load %arg2[%c6, %c0_53, %c0_54] : memref<8x8x128xf32, #tpu.memory_space<vmem>>, vector<1x8x128xf32>
    %69 = vector.shape_cast %68 : vector<1x8x128xf32> to vector<8x128xf32>
    %c5_55 = arith.constant 5 : index
    %c0_56 = arith.constant 0 : index
    %c0_57 = arith.constant 0 : index
    %70 = vector.load %arg3[%c5_55, %c0_56, %c0_57] : memref<8x8x128xf32, #tpu.memory_space<vmem>>, vector<1x8x128xf32>
    %71 = vector.shape_cast %70 : vector<1x8x128xf32> to vector<8x128xf32>
    %72 = arith.subf %69, %71 : vector<8x128xf32>
    %cst_58 = arith.constant 5.000000e-01 : f32
    %73 = vector.broadcast %cst_58 : f32 to vector<8x128xf32>
    %74 = arith.mulf %72, %73 : vector<8x128xf32>
    %75 = arith.addf %71, %74 : vector<8x128xf32>
    %c6_59 = arith.constant 6 : index
    %c0_60 = arith.constant 0 : index
    %c0_61 = arith.constant 0 : index
    %76 = vector.load %arg3[%c6_59, %c0_60, %c0_61] : memref<8x8x128xf32, #tpu.memory_space<vmem>>, vector<1x8x128xf32>
    %77 = vector.shape_cast %76 : vector<1x8x128xf32> to vector<8x128xf32>
    %78 = vector.shape_cast %75 : vector<8x128xf32> to vector<1x8x128xf32>
    tpu.vector_store %arg3[%c6_59, %c0_60, %c0_61], %78 {strides = array<i32>} : memref<8x8x128xf32, #tpu.memory_space<vmem>>, vector<1x8x128xf32>,
    %c7 = arith.constant 7 : index
    %c0_62 = arith.constant 0 : index
    %c0_63 = arith.constant 0 : index
    %79 = vector.load %arg2[%c7, %c0_62, %c0_63] : memref<8x8x128xf32, #tpu.memory_space<vmem>>, vector<1x8x128xf32>
    %80 = vector.shape_cast %79 : vector<1x8x128xf32> to vector<8x128xf32>
    %c6_64 = arith.constant 6 : index
    %c0_65 = arith.constant 0 : index
    %c0_66 = arith.constant 0 : index
    %81 = vector.load %arg3[%c6_64, %c0_65, %c0_66] : memref<8x8x128xf32, #tpu.memory_space<vmem>>, vector<1x8x128xf32>
    %82 = vector.shape_cast %81 : vector<1x8x128xf32> to vector<8x128xf32>
    %83 = arith.subf %80, %82 : vector<8x128xf32>
    %cst_67 = arith.constant 5.000000e-01 : f32
    %84 = vector.broadcast %cst_67 : f32 to vector<8x128xf32>
    %85 = arith.mulf %83, %84 : vector<8x128xf32>
    %86 = arith.addf %82, %85 : vector<8x128xf32>
    %c7_68 = arith.constant 7 : index
    %c0_69 = arith.constant 0 : index
    %c0_70 = arith.constant 0 : index
    %87 = vector.load %arg3[%c7_68, %c0_69, %c0_70] : memref<8x8x128xf32, #tpu.memory_space<vmem>>, vector<1x8x128xf32>
    %88 = vector.shape_cast %87 : vector<1x8x128xf32> to vector<8x128xf32>
    %89 = vector.shape_cast %86 : vector<8x128xf32> to vector<1x8x128xf32>
    tpu.vector_store %arg3[%c7_68, %c0_69, %c0_70], %89 {strides = array<i32>} : memref<8x8x128xf32, #tpu.memory_space<vmem>>, vector<1x8x128xf32>,
    %c7_71 = arith.constant 7 : index
    %c0_72 = arith.constant 0 : index
    %c0_73 = arith.constant 0 : index
    %90 = vector.load %arg3[%c7_71, %c0_72, %c0_73] : memref<8x8x128xf32, #tpu.memory_space<vmem>>, vector<1x8x128xf32>
    %91 = vector.shape_cast %90 : vector<1x8x128xf32> to vector<8x128xf32>
    %c0_74 = arith.constant 0 : index
    %c0_75 = arith.constant 0 : index
    %92 = vector.load %arg4[%c0_74, %c0_75] : memref<8x128xf32, #tpu.memory_space<vmem>>, vector<8x128xf32>
    tpu.vector_store %arg4[%c0_74, %c0_75], %91 {strides = array<i32>} : memref<8x128xf32, #tpu.memory_space<vmem>>, vector<8x128xf32>,
    return
  }
  func.func @transform_0(%arg0: i32, %arg1: i32) -> (i32, i32, i32) {
    %c0_i32 = arith.constant 0 : i32
    %c0_i32_0 = arith.constant 0 : i32
    return %arg1, %arg0, %c0_i32 : i32, i32, i32
  }
  func.func @transform_1(%arg0: i32, %arg1: i32) -> (i32, i32, i32) {
    %c0_i32 = arith.constant 0 : i32
    %c0_i32_0 = arith.constant 0 : i32
    return %arg1, %arg0, %c0_i32 : i32, i32, i32
  }
}

</mosaic_0001>

<llo_original>
// kernel: tpu_custom_call.1
$region0: #{tpu_custom_call.1}
  #allocation0 [shape = 'u32[]', space=smem, size = 0x4, offset = 0x4, fixed_abs, tag = 'smem constant byte address 0x4 - core index']
  #allocation1 [shape = 'u32[144,128]{1,0:T(1,128)}', space=vmem, size = 0x12000, scoped, tag = 'internal scratch']
  #allocation2 [shape = 'f32[8,128]{1,0:T(8,128)}', space=vmem, size = 0x1000, scoped, tag = 'scratch operand']
  %s0 = inlined_call_operand.hbm [shape: f32[8,16,128], index: 0, kind: input, shape index: {}]
  %s1 = inlined_call_operand.hbm [shape: f32[8,16,128], index: 1, kind: output, shape index: {}]
  %s2 = sld [smem:[#allocation0]]
  $region45: #{tpu_custom_call.1} parent=0
    _
  %s4 = ssub.s32 1, %s2
  %s5 = scalar_select 0, %s4, %s2
  $region1: #{tpu_custom_call.1} parent=0
    #allocation3 [shape = 'u8[65536]{0}', space=vmem, size = 0x10000, scoped, tag = 'input window, operand 0']
    #allocation4 [shape = 's32[2]{0}', space=sflag, size = 0x8, scoped, tag = 'scoped memory for tpu_custom_call.1']
    #allocation5 [shape = 's32[2]{0}', space=sflag, size = 0x8, scoped, tag = 'scoped memory for tpu_custom_call.1']
    #allocation6 [shape = 'u8[65536]{0}', space=vmem, size = 0x10000, scoped, tag = 'output window, operand 0']
    %6 = vsyncpa [#allocation4], 0
    %s7 = scalar_lea.sflag [#allocation4], 1
    %8 = vsyncpa %s7, 0
    %9 = vsyncpa [#allocation5], 0
    %s10 = scalar_lea.sflag [#allocation5], 1
    %11 = vsyncpa %s10, 0
    loop: start=0, step=1, limit=4
    $region2: #{tpu_custom_call.1} parent=1 // loop_pre_header
      _
    $region3: #{tpu_custom_call.1} parent=1 // loop_header
      %s13 = sphi 0, %s17
      %p14 = scmp.ge.s32.totalorder %s13, 4
      %s20 = sphi 0, %s32
      %s21 = sphi 0, %s28
      %s22 = sphi 0, %s20
      %s23 = sphi 0, %s21
      %s24 = sphi 0, %s22
      %s25 = sphi 0, %s23
      %s37 = sphi 0, %s39
      %s40 = sphi 0, %s37
      %s41 = sphi 0, %s40
      %s57 = sphi 0, %s41
      %s65 = sphi 0, %s67
      %s68 = sphi 0, %s65
      %s69 = sphi 0, %s68
      %s85 = sphi 0, %s69
    $region4: #{tpu_custom_call.1} parent=1 // loop_header_branch
      %16 = sbr.rel (%p14) target = $region8
    $region5: #{tpu_custom_call.1} parent=1 // loop_body
      %s18 = ssub.s32 %s13, 1
      %s19 = ssub.s32 %s13, 2
      %s26 = sadd.s32 1, %s21
      %p27 = scmp.ge.s32.totalorder %s26, 1
      %s28 = scalar_select %p27, 0, %s26
      %s29 = sadd.s32 1, %s20
      %s30 = scalar_select %p27, %s29, %s20
      %p31 = scmp.ge.s32.totalorder %s30, 2
      %s32 = scalar_select %p31, 0, %s30
      %s33 = ssub.s32 %s21, %s28
      %s34 = ssub.s32 %s20, %s32
      %s35 = sor.u32 %s33, %s34
      %p36 = scmp.eq.s32.totalorder %s35, 0
      %s38 = sadd.s32 %s37, 1
      %s39 = scalar_select %p36, %s37, %s38
      %p42 = pneg %p36
      %p43 = scmp.eq.s32.totalorder %s13, 1
      %p44 = por %p42, %p43
      %p45 = scmp.ne.s32.totalorder %s37, %s40
      %p46 = scmp.eq.s32.totalorder %s13, 0
      %p47 = por %p45, %p46
      %p48 = scmp.ne.s32.totalorder %s37, %s40
      %p49 = scmp.eq.s32.totalorder %s18, 1
      %p50 = por %p48, %p49
      %p51 = scmp.ne.s32.totalorder %s40, %s41
      %p52 = scmp.eq.s32.totalorder %s18, 0
      %p53 = por %p51, %p52
      %p54 = scmp.ne.s32.totalorder %s40, %s41
      %p55 = scmp.eq.s32.totalorder %s19, 1
      %p56 = por %p54, %p55
      %p58 = scmp.ne.s32.totalorder %s41, %s57
      %p59 = scmp.eq.s32.totalorder %s19, 0
      %p60 = por %p58, %p59
      %s61 = ssub.s32 %s21, %s28
      %s62 = ssub.s32 %s20, %s32
      %s63 = sor.u32 %s61, %s62
      %p64 = scmp.eq.s32.totalorder %s63, 0
      %s66 = sadd.s32 %s65, 1
      %s67 = scalar_select %p64, %s65, %s66
      %p70 = pneg %p64
      %p71 = scmp.eq.s32.totalorder %s13, 1
      %p72 = por %p70, %p71
      %p73 = scmp.ne.s32.totalorder %s65, %s68
      %p74 = scmp.eq.s32.totalorder %s13, 0
      %p75 = por %p73, %p74
      %p76 = scmp.ne.s32.totalorder %s65, %s68
      %p77 = scmp.eq.s32.totalorder %s18, 1
      %p78 = por %p76, %p77
      %p79 = scmp.ne.s32.totalorder %s68, %s69
      %p80 = scmp.eq.s32.totalorder %s18, 0
      %p81 = por %p79, %p80
      %p82 = scmp.ne.s32.totalorder %s68, %s69
      %p83 = scmp.eq.s32.totalorder %s19, 1
      %p84 = por %p82, %p83
      %p86 = scmp.ne.s32.totalorder %s69, %s85
      %p87 = scmp.eq.s32.totalorder %s19, 0
      %p88 = por %p86, %p87
      %p89 = scmp.le.s32.totalorder 1, %s13
      %p90 = scmp.lt.s32.totalorder %s13, 3
      %p91 = pnand %p89, %p90
      %p92 = pneg %p91
      // Predicated region
      $region9: #{tpu_custom_call.1} parent=5 // pred_check
        _
      $region10: #{tpu_custom_call.1} parent=5 // pred_check_branch
        %94 = sbr.rel (%p91) target = $region12
      $region11: #{tpu_custom_call.1} parent=5 // pred_region
        %s95 = ssub.s32 %s13, 1
      $region12: #{tpu_custom_call.1} parent=5 // pred_fallthru
        _
      %p96 = scmp.lt.s32.totalorder %s13, 2
      // Predicated region
      $region13: #{tpu_custom_call.1} parent=5 // pred_check
        %p97 = pneg %p96
      $region14: #{tpu_custom_call.1} parent=5 // pred_check_branch
        %99 = sbr.rel (%p97) target = $region16
      $region15: #{tpu_custom_call.1} parent=5 // pred_region
        // Predicated region
        $region17: #{tpu_custom_call.1} parent=15 // pred_check
          %p100 = pneg %p47
        $region18: #{tpu_custom_call.1} parent=15 // pred_check_branch
          %102 = sbr.rel (%p100) target = $region20
        $region19: #{tpu_custom_call.1} parent=15 // pred_region
          %s103 = sand.u32 %s37, 1
          %s104 = scalar_lea.sflag [#allocation4], %s103
          %s105 = sand.u32 %s37, 1
          %s106 = smul.addr %s105, 64
          %s107 = scalar_lea.vmem [#allocation3], %s106
          %s108 = smul.u32 8, %s21
          %s110 = ssub.s32 1024, 1024
          %111 = vsyncadd %s104, %s110
          %s112 = smul.addr %s108, 2
          %s113 = sadd.s32 %s20, %s112
          %s114 = smul.addr %s113, 128
          %s115 = scalar_lea.hbm %s0, %s114
          %s116 = sshll.u32 %s107, 4
          %s117 = int_to_ptr.vmem [resolvable:$true] %s116
          %122 = dma.hbm_to_vmem [thread:$0]  %s115, 1024, %s117, %s104, 256, 128, 8
        $region20: #{tpu_custom_call.1} parent=15 // pred_fallthru
          _
      $region16: #{tpu_custom_call.1} parent=5 // pred_fallthru
        _
      %p123 = scmp.le.s32.totalorder 1, %s13
      %p124 = scmp.lt.s32.totalorder %s13, 3
      %p125 = pnand %p123, %p124
      %p126 = pneg %p125
      // Predicated region
      $region21: #{tpu_custom_call.1} parent=5 // pred_check
        _
      $region22: #{tpu_custom_call.1} parent=5 // pred_check_branch
        %128 = sbr.rel (%p125) target = $region24
      $region23: #{tpu_custom_call.1} parent=5 // pred_region
        %s129 = ssub.s32 %s13, 1
        %s130 = sand.u32 %s40, 1
        %s131 = scalar_lea.sflag [#allocation4], %s130
        %s132 = sand.u32 %s40, 1
        %s133 = smul.addr %s132, 64
        %s134 = scalar_lea.vmem [#allocation3], %s133
        // Predicated region
        $region25: #{tpu_custom_call.1} parent=23 // pred_check
          %p135 = pneg %p53
        $region26: #{tpu_custom_call.1} parent=23 // pred_check_branch
          %137 = sbr.rel (%p135) target = $region28
        $region27: #{tpu_custom_call.1} parent=23 // pred_region
          %138 = dma.done %s131, 1024
        $region28: #{tpu_custom_call.1} parent=23 // pred_fallthru
          _
        %s139 = sand.u32 %s40, 1
        %s140 = scalar_lea.sflag [#allocation4], %s139
        %s141 = sand.u32 %s40, 1
        %s142 = smul.addr %s141, 64
        %s143 = scalar_lea.vmem [#allocation3], %s142
        %p144 = pneg %p53
        %p145 = pneg %p50
        %p146 = pneg %p81
        %p147 = pneg %p78
        %s148 = sand.u32 %s68, 1
        %s149 = scalar_lea.sflag [#allocation5], %s148
        %s150 = sand.u32 %s68, 1
        %s151 = smul.addr %s150, 64
        %s152 = scalar_lea.vmem [#allocation6], %s151
        %s153 = smul.u32 8, %s23
        %s154 = smul.u32 8, %s23
        %p155 = scmp.eq.s32.totalorder %s23, 0
        // Predicated region
        $region29: #{tpu_custom_call.1} parent=23 // pred_check
          %p156 = pneg %p155
        $region30: #{tpu_custom_call.1} parent=23 // pred_check_branch
          %158 = sbr.rel (%p156) target = $region32
        $region31: #{tpu_custom_call.1} parent=23 // pred_region
          %159 = vst [vmem:[#allocation2] sm:$0xff] 0.0
        $region32: #{tpu_custom_call.1} parent=23 // pred_fallthru
          _
        %v160 = vld [vmem:[%s134] sm:$0xff]
        %v161 = vld [vmem:[#allocation2] sm:$0xff]
        %v162 = vsub.f32 %v160, %v161
        %v163 = vmul.f32 %v162, 0.5
        %v164 = vadd.f32 %v161, %v163
        %165 = vst [vmem:[%s152] sm:$0xff] %v164
        %s166 = scalar_lea.vmem %s134, 8 [#allocation3]
        %v167 = vld [vmem:[%s166] sm:$0xff]
        %v168 = vld [vmem:[%s152] sm:$0xff]
        %v169 = vsub.f32 %v167, %v168
        %v170 = vmul.f32 %v169, 0.5
        %v171 = vadd.f32 %v168, %v170
        %s172 = scalar_lea.vmem %s152, 8 [#allocation6]
        %173 = vst [vmem:[%s172] sm:$0xff] %v171
        %s174 = scalar_lea.vmem %s134, 16 [#allocation3]
        %v175 = vld [vmem:[%s174] sm:$0xff]
        %v176 = vld [vmem:[%s172] sm:$0xff]
        %v177 = vsub.f32 %v175, %v176
        %v178 = vmul.f32 %v177, 0.5
        %v179 = vadd.f32 %v176, %v178
        %s180 = scalar_lea.vmem %s152, 16 [#allocation6]
        %181 = vst [vmem:[%s180] sm:$0xff] %v179
        %s182 = scalar_lea.vmem %s134, 24 [#allocation3]
        %v183 = vld [vmem:[%s182] sm:$0xff]
        %v184 = vld [vmem:[%s180] sm:$0xff]
        %v185 = vsub.f32 %v183, %v184
        %v186 = vmul.f32 %v185, 0.5
        %v187 = vadd.f32 %v184, %v186
        %s188 = scalar_lea.vmem %s152, 24 [#allocation6]
        %189 = vst [vmem:[%s188] sm:$0xff] %v187
        %s190 = scalar_lea.vmem %s134, 32 [#allocation3]
        %v191 = vld [vmem:[%s190] sm:$0xff]
        %v192 = vld [vmem:[%s188] sm:$0xff]
        %v193 = vsub.f32 %v191, %v192
        %v194 = vmul.f32 %v193, 0.5
        %v195 = vadd.f32 %v192, %v194
        %s196 = scalar_lea.vmem %s152, 32 [#allocation6]
        %197 = vst [vmem:[%s196] sm:$0xff] %v195
        %s198 = scalar_lea.vmem %s134, 40 [#allocation3]
        %v199 = vld [vmem:[%s198] sm:$0xff]
        %v200 = vld [vmem:[%s196] sm:$0xff]
        %v201 = vsub.f32 %v199, %v200
        %v202 = vmul.f32 %v201, 0.5
        %v203 = vadd.f32 %v200, %v202
        %s204 = scalar_lea.vmem %s152, 40 [#allocation6]
        %205 = vst [vmem:[%s204] sm:$0xff] %v203
        %s206 = scalar_lea.vmem %s134, 48 [#allocation3]
        %v207 = vld [vmem:[%s206] sm:$0xff]
        %v208 = vld [vmem:[%s204] sm:$0xff]
        %v209 = vsub.f32 %v207, %v208
        %v210 = vmul.f32 %v209, 0.5
        %v211 = vadd.f32 %v208, %v210
        %s212 = scalar_lea.vmem %s152, 48 [#allocation6]
        %213 = vst [vmem:[%s212] sm:$0xff] %v211
        %s214 = scalar_lea.vmem %s134, 56 [#allocation3]
        %v215 = vld [vmem:[%s214] sm:$0xff]
        %v216 = vld [vmem:[%s212] sm:$0xff]
        %v217 = vsub.f32 %v215, %v216
        %v218 = vmul.f32 %v217, 0.5
        %v219 = vadd.f32 %v216, %v218
        %s220 = scalar_lea.vmem %s152, 56 [#allocation6]
        %221 = vst [vmem:[%s220] sm:$0xff] %v219
        %v222 = vld [vmem:[%s220] sm:$0xff]
        %223 = vst [vmem:[#allocation2] sm:$0xff] %v222
        %s224 = sand.u32 %s68, 1
        %s225 = scalar_lea.sflag [#allocation5], %s224
        %s226 = sand.u32 %s68, 1
        %s227 = smul.addr %s226, 64
        %s228 = scalar_lea.vmem [#allocation6], %s227
        // Predicated region
        $region33: #{tpu_custom_call.1} parent=23 // pred_check
          %p229 = pneg %p78
        $region34: #{tpu_custom_call.1} parent=23 // pred_check_branch
          %231 = sbr.rel (%p229) target = $region36
        $region35: #{tpu_custom_call.1} parent=23 // pred_region
          %s232 = smul.u32 8, %s23
          %s234 = ssub.s32 1024, 1024
          %235 = vsyncadd %s225, %s234
          %s236 = smul.addr %s232, 2
          %s237 = sadd.s32 %s22, %s236
          %s238 = smul.addr %s237, 128
          %s239 = scalar_lea.hbm %s1, %s238
          %s240 = sshll.u32 %s228, 4
          %s241 = int_to_ptr.vmem [resolvable:$true] %s240
          %246 = dma.vmem_to_hbm [thread:$0]  %s241, 1024, %s239, %s225, 128, 256, 8
        $region36: #{tpu_custom_call.1} parent=23 // pred_fallthru
          _
      $region24: #{tpu_custom_call.1} parent=5 // pred_fallthru
        _
      %p247 = scmp.le.s32.totalorder 2, %s13
      // Predicated region
      $region37: #{tpu_custom_call.1} parent=5 // pred_check
        %p248 = pneg %p247
      $region38: #{tpu_custom_call.1} parent=5 // pred_check_branch
        %250 = sbr.rel (%p248) target = $region40
      $region39: #{tpu_custom_call.1} parent=5 // pred_region
        %s251 = ssub.s32 %s13, 2
        // Predicated region
        $region41: #{tpu_custom_call.1} parent=39 // pred_check
          %p252 = pneg %p84
        $region42: #{tpu_custom_call.1} parent=39 // pred_check_branch
          %254 = sbr.rel (%p252) target = $region44
        $region43: #{tpu_custom_call.1} parent=39 // pred_region
          %s255 = sand.u32 %s69, 1
          %s256 = scalar_lea.sflag [#allocation5], %s255
          %s257 = sand.u32 %s69, 1
          %s258 = smul.addr %s257, 64
          %s259 = scalar_lea.vmem [#allocation6], %s258
          %260 = dma.done %s256, 1024
        $region44: #{tpu_custom_call.1} parent=39 // pred_fallthru
          _
      $region40: #{tpu_custom_call.1} parent=5 // pred_fallthru
        _
    $region6: #{tpu_custom_call.1} parent=1 // loop_footer
      %s17 = sadd.s32 1, %s13
    $region7: #{tpu_custom_call.1} parent=1 // loop_footer_branch
      %12 = sbr.rel target = $region3
    $region8: #{tpu_custom_call.1} parent=1 // loop_exit
      _
    %261 = vsyncpa [#allocation4], 1
    %s262 = scalar_lea.sflag [#allocation4], 1
    %263 = vsyncpa %s262, 1
    %264 = vsyncpa [#allocation5], 1
    %s265 = scalar_lea.sflag [#allocation5], 1
    %266 = vsyncpa %s265, 1

</llo_original>
